<compile_context>
chip_gen: v5e
topology: v5e:2x2
jax: 0.10.0
libtpu: 0.0.40
codegen_flags: <defaults>
</compile_context>

<pallas_src>
import functools

import jax
import jax.numpy as jnp
from jax.experimental import pallas as pl
from jax.experimental.pallas import tpu as pltpu


def _memory_cell_kernel(x_ref, wcat_ref, bcat_ref, wy_ref, by_ref, out_ref, *,
                        input_size, memory_size, output_size):
    nm, no = memory_size, output_size
    x = x_ref[...]                                   # [tm, D] f32 (D = input + memory)
    m = x[:, input_size:]                            # previous memory state, f32, lane-aligned
    xb = x.astype(jnp.bfloat16)                      # bf16 operand for the MXU

    # --- one wide matmul for all four x-side projections ----------------------
    # columns: [ r | n | p | z ]  ->  [tm, 2Nm + 2No], f32 accumulation + f32 bias
    proj = jnp.dot(xb, wcat_ref[...], preferred_element_type=jnp.float32) + bcat_ref[...]

    r = jax.nn.sigmoid(proj[:, :nm])                 # remember gate
    n = jnp.tanh(proj[:, nm:2 * nm])                 # candidate memory
    p = jax.nn.sigmoid(proj[:, 2 * nm:2 * nm + no])  # passthrough gate
    z = jnp.tanh(proj[:, 2 * nm + no:])              # output-from-input path

    m_new = (1.0 - r) * m + r * n                    # [tm, Nm] f32

    ym = jnp.tanh(jnp.dot(m_new.astype(jnp.bfloat16), wy_ref[...],
                          preferred_element_type=jnp.float32) + by_ref[...])
    y = (1.0 - p) * ym + p * z                       # [tm, No] f32

    # --- fused concat([y, m_new], -1) written as a lane-dense slab ------------
    out_ref[:, :no] = y.astype(out_ref.dtype)
    out_ref[:, no:] = m_new.astype(out_ref.dtype)


def _vmem_cap_bytes():
    """Per-generation VMEM budget: 7/8 of physical capacity (headroom for compiler
    scratch / semaphores). ~56 MiB on v7x, ~112 MiB on v5e/v6e."""
    cap = 128 * 1024 * 1024
    try:
        info = pltpu.get_tpu_info()
        cap = int(getattr(info, "vmem_capacity_bytes", cap))
    except Exception:
        pass
    return (cap * 7) // 8


def memory_cell_forward(x, Wr, br, Wn, bn, Wp, bp, Wz, bz, Wy, by, *,
                        input_size, memory_size, output_size, tm=512):
    """Fused MemoryCell forward.  x: [batch, input_size + memory_size] (f32)."""
    M, D = x.shape
    assert D == input_size + memory_size
    assert Wr.shape == (D, memory_size) and br.shape == (memory_size,)
    assert Wn.shape == (D, memory_size) and bn.shape == (memory_size,)
    assert Wp.shape == (D, output_size) and bp.shape == (output_size,)
    assert Wz.shape == (D, output_size) and bz.shape == (output_size,)
    assert Wy.shape == (memory_size, output_size) and by.shape == (output_size,)
    # Lane alignment: keeps the in-kernel column splits and the [y | m_new] stores
    # on 128-lane boundaries (unmasked vst, no XLU relayouts).
    assert input_size % 128 == 0 and memory_size % 128 == 0 and output_size % 128 == 0
    assert tm % 8 == 0

    nm, no = memory_size, output_size
    n_cat = 2 * nm + 2 * no
    n_out = no + nm

    # Fuse the four x-side projections into one bf16 weight + one f32 bias row.
    Wcat = jnp.concatenate([Wr, Wn, Wp, Wz], axis=1).astype(jnp.bfloat16)   # [D, n_cat]
    bcat = jnp.concatenate([br, bn, bp, bz]).astype(jnp.float32).reshape(1, n_cat)
    Wyb = Wy.astype(jnp.bfloat16)
    by2 = by.astype(jnp.float32).reshape(1, no)

    # --- batch tiling: no pad / no trailing slice ------------------------------
    if M <= 256:
        tm_eff = M                                   # single full-array block
    else:
        # Keep >= 2 blocks so the "parallel" batch axis can shard across v7x's 2 TCs.
        half8 = ((pl.cdiv(M, 2) + 7) // 8) * 8
        tm_eff = min(tm, half8)
    grid = (pl.cdiv(M, tm_eff),)                     # ragged last block is masked by Pallas

    # --- VMEM budget / compiler params -----------------------------------------
    x_itemsize = x.dtype.itemsize
    weight_bytes = (D * n_cat + nm * no) * 2                       # bf16, resident
    bias_bytes = (n_cat + no) * 4
    io_bytes = 2 * tm_eff * (D + n_out) * x_itemsize               # double-buffered x/out
    fused_bytes = tm_eff * (n_cat + 6 * max(nm, no)) * 4           # in-flight f32 intermediates
    est = weight_bytes + bias_bytes + io_bytes + fused_bytes
    vmem_limit = int(min(max(2 * est, 32 * 1024 * 1024), _vmem_cap_bytes()))

    weight_elems = D * n_cat + nm * no
    cost = pl.CostEstimate(
        flops=2 * M * weight_elems,
        transcendentals=M * (2 * nm + 3 * no),
        bytes_accessed=M * (D + n_out) * x_itemsize + weight_bytes + bias_bytes,
    )

    kernel = functools.partial(
        _memory_cell_kernel,
        input_size=input_size, memory_size=memory_size, output_size=output_size)

    def _const(shape):
        # Weights / biases: constant block index -> fetched once, VMEM-resident.
        return pl.BlockSpec(shape, lambda i: (0, 0))

    out = pl.pallas_call(
        kernel,
        out_shape=jax.ShapeDtypeStruct((M, n_out), x.dtype),
        grid_spec=pltpu.PrefetchScalarGridSpec(
            num_scalar_prefetch=0,
            grid=grid,
            in_specs=[
                pl.BlockSpec((tm_eff, D), lambda i: (i, 0)),     # x tile (streams)
                _const((D, n_cat)), _const((1, n_cat)),          # Wcat, bcat (resident)
                _const((nm, no)), _const((1, no)),               # Wy,  by   (resident)
            ],
            out_specs=pl.BlockSpec((tm_eff, n_out), lambda i: (i, 0)),
        ),
        compiler_params=pltpu.CompilerParams(
            dimension_semantics=("parallel",),
            vmem_limit_bytes=vmem_limit,
        ),
        cost_estimate=cost,
    )(x, Wcat, bcat, Wyb, by2)

    return out


if __name__ == "__main__":
    # Small, deterministic example consistent with the module:
    # x: [batch, input_size + memory_size]; output: [batch, output_size + memory_size]
    batch, input_size, memory_size, output_size = 32, 128, 128, 128
    D = input_size + memory_size

    key = jax.random.PRNGKey(0)
    ks = jax.random.split(key, 11)

    def mk_w(k, r, c):
        return jax.random.normal(k, (r, c), dtype=jnp.float32) * 0.05

    def mk_b(k, c):
        return jax.random.normal(k, (c,), dtype=jnp.float32) * 0.1

    x = jax.random.normal(ks[0], (batch, D), dtype=jnp.float32)
    Wr, br = mk_w(ks[1], D, memory_size), mk_b(ks[2], memory_size)
    Wn, bn = mk_w(ks[3], D, memory_size), mk_b(ks[4], memory_size)
    Wp, bp = mk_w(ks[5], D, output_size), mk_b(ks[6], output_size)
    Wz, bz = mk_w(ks[7], D, output_size), mk_b(ks[8], output_size)
    Wy, by = mk_w(ks[9], memory_size, output_size), mk_b(ks[10], output_size)

    out = memory_cell_forward(
        x, Wr, br, Wn, bn, Wp, bp, Wz, bz, Wy, by,
        input_size=input_size, memory_size=memory_size, output_size=output_size)
    out = jax.block_until_ready(out)

    # Pure-JAX f32 reference matching the torch module's forward exactly.
    m = x[:, input_size:]
    r = jax.nn.sigmoid(x @ Wr + br)
    m_new = (1.0 - r) * m + r * jnp.tanh(x @ Wn + bn)
    p = jax.nn.sigmoid(x @ Wp + bp)
    y = (1.0 - p) * jnp.tanh(m_new @ Wy + by) + p * jnp.tanh(x @ Wz + bz)
    ref = jnp.concatenate([y, m_new], axis=-1)

    assert out.shape == (batch, output_size + memory_size)
    # bf16 MXU operands (f32 accumulation / gating) -> small tolerance vs f32 reference.
    assert jnp.allclose(out, ref, atol=2e-2, rtol=2e-2), float(
        jnp.max(jnp.abs(out - ref)))

    print("KERNEL_OK")
</pallas_src>

<mosaic_0001>
module attributes {stable_mosaic.version = 11 : i64} {
  func.func @_memory_cell_kernel(%arg0: i32, %arg1: memref<32x256xf32, #tpu.memory_space<vmem>>, %arg2: memref<256x512xbf16, #tpu.memory_space<vmem>>, %arg3: memref<1x512xf32, #tpu.memory_space<vmem>>, %arg4: memref<128x128xbf16, #tpu.memory_space<vmem>>, %arg5: memref<1x128xf32, #tpu.memory_space<vmem>>, %arg6: memref<32x256xf32, #tpu.memory_space<vmem>>) attributes {dimension_semantics = [#tpu.dimension_semantics<parallel>], iteration_bounds = array<i64: 1>, scalar_prefetch = 0 : i64, scratch_operands = 0 : i64, tpu.core_type = #tpu.core_type<tc>, window_params = [{transform_indices = @transform_0, window_bounds = array<i64: 32, 256>}, {pipeline_mode = #tpu.pipeline_mode<synchronous>, transform_indices = @transform_1, window_bounds = array<i64: 256, 512>}, {pipeline_mode = #tpu.pipeline_mode<synchronous>, transform_indices = @transform_2, window_bounds = array<i64: 1, 512>}, {pipeline_mode = #tpu.pipeline_mode<synchronous>, transform_indices = @transform_3, window_bounds = array<i64: 128, 128>}, {pipeline_mode = #tpu.pipeline_mode<synchronous>, transform_indices = @transform_4, window_bounds = array<i64: 1, 128>}, {transform_indices = @transform_5, window_bounds = array<i64: 32, 256>}]} {
    %c0 = arith.constant 0 : index
    %c0_0 = arith.constant 0 : index
    %0 = vector.load %arg1[%c0, %c0_0] : memref<32x256xf32, #tpu.memory_space<vmem>>, vector<32x256xf32>
    %1 = vector.extract_strided_slice %0 {offsets = [0, 128], sizes = [32, 128], strides = [1, 1]} : vector<32x256xf32> to vector<32x128xf32>
    %2 = arith.truncf %0 : vector<32x256xf32> to vector<32x256xbf16>
    %c0_1 = arith.constant 0 : index
    %c0_2 = arith.constant 0 : index
    %3 = vector.load %arg2[%c0_1, %c0_2] : memref<256x512xbf16, #tpu.memory_space<vmem>>, vector<256x512xbf16>
    %cst = arith.constant dense<0.000000e+00> : vector<32x512xf32>
    %4 = tpu.matmul %2, %3, %cst {dimension_numbers = #tpu.dot_dimension_numbers<[1], [0], [0], [1], [0, 0, 1, 1], [], []>} : vector<32x256xbf16>, vector<256x512xbf16>, vector<32x512xf32> -> vector<32x512xf32>
    %c0_3 = arith.constant 0 : index
    %c0_4 = arith.constant 0 : index
    %5 = vector.load %arg3[%c0_3, %c0_4] : memref<1x512xf32, #tpu.memory_space<vmem>>, vector<1x512xf32>
    %6 = vector.broadcast %5 : vector<1x512xf32> to vector<32x512xf32>
    %7 = arith.addf %4, %6 : vector<32x512xf32>
    %8 = vector.extract_strided_slice %7 {offsets = [0, 0], sizes = [32, 128], strides = [1, 1]} : vector<32x512xf32> to vector<32x128xf32>
    %9 = arith.negf %8 : vector<32x128xf32>
    %10 = math.exp %9 : vector<32x128xf32>
    %cst_5 = arith.constant 1.000000e+00 : f32
    %11 = vector.broadcast %cst_5 : f32 to vector<32x128xf32>
    %12 = arith.addf %11, %10 : vector<32x128xf32>
    %13 = arith.divf %11, %12 : vector<32x128xf32>
    %14 = vector.extract_strided_slice %7 {offsets = [0, 128], sizes = [32, 128], strides = [1, 1]} : vector<32x512xf32> to vector<32x128xf32>
    %15 = math.tanh %14 : vector<32x128xf32>
    %16 = vector.extract_strided_slice %7 {offsets = [0, 256], sizes = [32, 128], strides = [1, 1]} : vector<32x512xf32> to vector<32x128xf32>
    %17 = arith.negf %16 : vector<32x128xf32>
    %18 = math.exp %17 : vector<32x128xf32>
    %cst_6 = arith.constant 1.000000e+00 : f32
    %19 = vector.broadcast %cst_6 : f32 to vector<32x128xf32>
    %20 = arith.addf %19, %18 : vector<32x128xf32>
    %21 = arith.divf %19, %20 : vector<32x128xf32>
    %22 = vector.extract_strided_slice %7 {offsets = [0, 384], sizes = [32, 128], strides = [1, 1]} : vector<32x512xf32> to vector<32x128xf32>
    %23 = math.tanh %22 : vector<32x128xf32>
    %cst_7 = arith.constant 1.000000e+00 : f32
    %24 = vector.broadcast %cst_7 : f32 to vector<32x128xf32>
    %25 = arith.subf %24, %13 : vector<32x128xf32>
    %26 = arith.mulf %25, %1 : vector<32x128xf32>
    %27 = arith.mulf %13, %15 : vector<32x128xf32>
    %28 = arith.addf %26, %27 : vector<32x128xf32>
    %29 = arith.truncf %28 : vector<32x128xf32> to vector<32x128xbf16>
    %c0_8 = arith.constant 0 : index
    %c0_9 = arith.constant 0 : index
    %30 = vector.load %arg4[%c0_8, %c0_9] : memref<128x128xbf16, #tpu.memory_space<vmem>>, vector<128x128xbf16>
    %cst_10 = arith.constant dense<0.000000e+00> : vector<32x128xf32>
    %31 = tpu.matmul %29, %30, %cst_10 {dimension_numbers = #tpu.dot_dimension_numbers<[1], [0], [0], [1], [0, 0, 1, 1], [], []>} : vector<32x128xbf16>, vector<128x128xbf16>, vector<32x128xf32> -> vector<32x128xf32>
    %c0_11 = arith.constant 0 : index
    %c0_12 = arith.constant 0 : index
    %32 = vector.load %arg5[%c0_11, %c0_12] : memref<1x128xf32, #tpu.memory_space<vmem>>, vector<1x128xf32>
    %33 = vector.broadcast %32 : vector<1x128xf32> to vector<32x128xf32>
    %34 = arith.addf %31, %33 : vector<32x128xf32>
    %35 = math.tanh %34 : vector<32x128xf32>
    %cst_13 = arith.constant 1.000000e+00 : f32
    %36 = vector.broadcast %cst_13 : f32 to vector<32x128xf32>
    %37 = arith.subf %36, %21 : vector<32x128xf32>
    %38 = arith.mulf %37, %35 : vector<32x128xf32>
    %39 = arith.mulf %21, %23 : vector<32x128xf32>
    %40 = arith.addf %38, %39 : vector<32x128xf32>
    %c0_14 = arith.constant 0 : index
    %c0_15 = arith.constant 0 : index
    %41 = vector.load %arg6[%c0_14, %c0_15] : memref<32x256xf32, #tpu.memory_space<vmem>>, vector<32x128xf32>
    tpu.vector_store %arg6[%c0_14, %c0_15], %40 {strides = array<i32>} : memref<32x256xf32, #tpu.memory_space<vmem>>, vector<32x128xf32>,
    %c0_16 = arith.constant 0 : index
    %c128 = arith.constant 128 : index
    %42 = vector.load %arg6[%c0_16, %c128] : memref<32x256xf32, #tpu.memory_space<vmem>>, vector<32x128xf32>
    tpu.vector_store %arg6[%c0_16, %c128], %28 {strides = array<i32>} : memref<32x256xf32, #tpu.memory_space<vmem>>, vector<32x128xf32>,
    return
  }
  func.func @transform_0(%arg0: i32) -> (i32, i32) {
    %c0_i32 = arith.constant 0 : i32
    %c0_i32_0 = arith.constant 0 : i32
    return %arg0, %c0_i32 : i32, i32
  }
  func.func @transform_1(%arg0: i32) -> (i32, i32) {
    %c0_i32 = arith.constant 0 : i32
    %c0_i32_0 = arith.constant 0 : i32
    %c0_i32_1 = arith.constant 0 : i32
    return %c0_i32, %c0_i32_0 : i32, i32
  }
  func.func @transform_2(%arg0: i32) -> (i32, i32) {
    %c0_i32 = arith.constant 0 : i32
    %c0_i32_0 = arith.constant 0 : i32
    %c0_i32_1 = arith.constant 0 : i32
    return %c0_i32, %c0_i32_0 : i32, i32
  }
  func.func @transform_3(%arg0: i32) -> (i32, i32) {
    %c0_i32 = arith.constant 0 : i32
    %c0_i32_0 = arith.constant 0 : i32
    %c0_i32_1 = arith.constant 0 : i32
    return %c0_i32, %c0_i32_0 : i32, i32
  }
  func.func @transform_4(%arg0: i32) -> (i32, i32) {
    %c0_i32 = arith.constant 0 : i32
    %c0_i32_0 = arith.constant 0 : i32
    %c0_i32_1 = arith.constant 0 : i32
    return %c0_i32, %c0_i32_0 : i32, i32
  }
  func.func @transform_5(%arg0: i32) -> (i32, i32) {
    %c0_i32 = arith.constant 0 : i32
    %c0_i32_0 = arith.constant 0 : i32
    return %arg0, %c0_i32 : i32, i32
  }
}

</mosaic_0001>

<llo_original>
// kernel: tpu_custom_call.1
$region0: #{tpu_custom_call.1}
  #allocation0 [shape = 'u32[]', space=smem, size = 0x4, offset = 0x4, fixed_abs, tag = 'smem constant byte address 0x4 - core index']
  #allocation1 [shape = 'u32[72,128]{1,0:T(1,128)}', space=vmem, size = 0x9000, scoped, tag = 'internal scratch']
  %s0 = inlined_call_operand.hbm [shape: f32[32,256], index: 0, kind: input, shape index: {}]
  %s1 = inlined_call_operand.hbm [shape: bf16[256,512], index: 1, kind: input, shape index: {}]
  %s2 = inlined_call_operand.hbm [shape: f32[1,512], index: 2, kind: input, shape index: {}]
  %s3 = inlined_call_operand.hbm [shape: bf16[128,128], index: 3, kind: input, shape index: {}]
  %s4 = inlined_call_operand.vmem [shape: f32[1,128], index: 4, kind: input, shape index: {}]
  %s5 = inlined_call_operand.hbm [shape: f32[32,256], index: 5, kind: output, shape index: {}]
  %s6 = sld [smem:[#allocation0]]
  $region46: #{tpu_custom_call.1} parent=0
    _
  %s8 = ssub.s32 1, %s6
  %s9 = scalar_select 0, %s8, %s6
  $region1: #{tpu_custom_call.1} parent=0
    #allocation2 [shape = 'u8[32768]{0}', space=vmem, size = 0x8000, scoped, tag = 'input window, operand 0, single buffered']
    #allocation3 [shape = 's32[1]{0}', space=sflag, size = 0x4, scoped, tag = 'scoped memory for tpu_custom_call.1']
    #allocation4 [shape = 's32[1]{0}', space=sflag, size = 0x4, scoped, tag = 'scoped memory for tpu_custom_call.1']
    #allocation5 [shape = 'u8[262144]{0}', space=vmem, size = 0x40000, scoped, tag = 'input window, operand 1, single buffered']
    #allocation6 [shape = 's32[1]{0}', space=sflag, size = 0x4, scoped, tag = 'scoped memory for tpu_custom_call.1']
    #allocation7 [shape = 'u8[2048]{0}', space=vmem, size = 0x800, scoped, tag = 'input window, operand 2, single buffered']
    #allocation8 [shape = 'u8[32768]{0}', space=vmem, size = 0x8000, scoped, tag = 'input window, operand 3, single buffered']
    #allocation9 [shape = 's32[1]{0}', space=sflag, size = 0x4, scoped, tag = 'scoped memory for tpu_custom_call.1']
    #allocation10 [shape = 'u8[32768]{0}', space=vmem, size = 0x8000, scoped, tag = 'output window, operand 0, single buffered']
    %10 = vsyncpa [#allocation3], 0
    %11 = vsyncpa [#allocation6], 0
    %12 = vsyncpa [#allocation9], 0
    %13 = vsyncpa [#allocation4], 0
    // Predicated region
    $region2: #{tpu_custom_call.1} parent=1 // pred_check
      _
    $region3: #{tpu_custom_call.1} parent=1 // pred_check_branch
      %15 = sbr.rel (0) target = $region5
    $region4: #{tpu_custom_call.1} parent=1 // pred_region
      %17 = vsyncadd [#allocation3], 0
      %s18 = sshll.u32 %s0, 4
      %s19 = int_to_ptr.hbm [resolvable:$true] %s18
      %s20 = sshll.u32 [#allocation2], 4
      %s21 = int_to_ptr.vmem [resolvable:$true] %s20
      %26 = dma.hbm_to_vmem [thread:$0]  %s19, 1024, %s21, [#allocation3], 256, 256, 16
    $region5: #{tpu_custom_call.1} parent=1 // pred_fallthru
      _
    // Predicated region
    $region6: #{tpu_custom_call.1} parent=1 // pred_check
      _
    $region7: #{tpu_custom_call.1} parent=1 // pred_check_branch
      %28 = sbr.rel (0) target = $region9
    $region8: #{tpu_custom_call.1} parent=1 // pred_region
      %30 = vsyncadd [#allocation6], 0
      %s31 = sshll.u32 %s1, 4
      %s32 = int_to_ptr.hbm [resolvable:$true] %s31
      %s33 = sshll.u32 [#allocation5], 4
      %s34 = int_to_ptr.vmem [resolvable:$true] %s33
      %39 = dma.hbm_to_vmem [thread:$0]  %s32, 8192, %s34, [#allocation6], 256, 256, 16
    $region9: #{tpu_custom_call.1} parent=1 // pred_fallthru
      _
    // Predicated region
    $region10: #{tpu_custom_call.1} parent=1 // pred_check
      _
    $region11: #{tpu_custom_call.1} parent=1 // pred_check_branch
      %41 = sbr.rel (0) target = $region13
    $region12: #{tpu_custom_call.1} parent=1 // pred_region
      %43 = vsyncadd [#allocation6], 0
      %s45 = sshll.u32 %s2, 4
      %s46 = int_to_ptr.hbm [resolvable:$true] %s45
      %s47 = sshll.u32 [#allocation7], 4
      %s48 = int_to_ptr.vmem [resolvable:$true] %s47
      %50 = dma.hbm_to_vmem [thread:$0]  %s46, 64, %s48, [#allocation6]
    $region13: #{tpu_custom_call.1} parent=1 // pred_fallthru
      _
    // Predicated region
    $region14: #{tpu_custom_call.1} parent=1 // pred_check
      _
    $region15: #{tpu_custom_call.1} parent=1 // pred_check_branch
      %52 = sbr.rel (0) target = $region17
    $region16: #{tpu_custom_call.1} parent=1 // pred_region
      %54 = vsyncadd [#allocation9], 0
      %s55 = sshll.u32 %s3, 4
      %s56 = int_to_ptr.hbm [resolvable:$true] %s55
      %s57 = sshll.u32 [#allocation8], 4
      %s58 = int_to_ptr.vmem [resolvable:$true] %s57
      %63 = dma.hbm_to_vmem [thread:$0]  %s56, 1024, %s58, [#allocation9], 64, 64, 4
    $region17: #{tpu_custom_call.1} parent=1 // pred_fallthru
      _
    // Predicated region
    $region18: #{tpu_custom_call.1} parent=1 // pred_check
      _
    $region19: #{tpu_custom_call.1} parent=1 // pred_check_branch
      %65 = sbr.rel (0) target = $region21
    $region20: #{tpu_custom_call.1} parent=1 // pred_region
      _
    $region21: #{tpu_custom_call.1} parent=1 // pred_fallthru
      _
    // Predicated region
    $region22: #{tpu_custom_call.1} parent=1 // pred_check
      _
    $region23: #{tpu_custom_call.1} parent=1 // pred_check_branch
      %67 = sbr.rel (0) target = $region25
    $region24: #{tpu_custom_call.1} parent=1 // pred_region
      %69 = dma.done [#allocation3], 1024
    $region25: #{tpu_custom_call.1} parent=1 // pred_fallthru
      _
    // Predicated region
    $region26: #{tpu_custom_call.1} parent=1 // pred_check
      _
    $region27: #{tpu_custom_call.1} parent=1 // pred_check_branch
      %71 = sbr.rel (0) target = $region29
    $region28: #{tpu_custom_call.1} parent=1 // pred_region
      %73 = dma.done [#allocation6], 8192
    $region29: #{tpu_custom_call.1} parent=1 // pred_fallthru
      _
    // Predicated region
    $region30: #{tpu_custom_call.1} parent=1 // pred_check
      _
    $region31: #{tpu_custom_call.1} parent=1 // pred_check_branch
      %75 = sbr.rel (0) target = $region33
    $region32: #{tpu_custom_call.1} parent=1 // pred_region
      %77 = dma.done [#allocation6], 64
    $region33: #{tpu_custom_call.1} parent=1 // pred_fallthru
      _
    // Predicated region
    $region34: #{tpu_custom_call.1} parent=1 // pred_check
      _
    $region35: #{tpu_custom_call.1} parent=1 // pred_check_branch
      %79 = sbr.rel (0) target = $region37
    $region36: #{tpu_custom_call.1} parent=1 // pred_region
      %81 = dma.done [#allocation9], 1024
    $region37: #{tpu_custom_call.1} parent=1 // pred_fallthru
      _
    %v82 = vld [vmem:[#allocation2] sm:$0xff]
    %v83 = vld [vmem:[#allocation2 + $0x8] sm:$0xff]
    %v84 = vld [vmem:[#allocation2 + $0x10] sm:$0xff]
    %v85 = vld [vmem:[#allocation2 + $0x18] sm:$0xff]
    %v86 = vld [vmem:[#allocation2 + $0x20] sm:$0xff]
    %v87 = vld [vmem:[#allocation2 + $0x28] sm:$0xff]
    %v88 = vld [vmem:[#allocation2 + $0x30] sm:$0xff]
    %v89 = vld [vmem:[#allocation2 + $0x38] sm:$0xff]
    %v90 = vpack.c.bf16 %v84, %v82
    %v91 = vpack.c.bf16 %v85, %v83
    %v92 = vpack.c.bf16 %v88, %v86
    %v93 = vpack.c.bf16 %v89, %v87
    %v94 = vld [vmem:[#allocation5] sm:$0xff]
    %v95 = vld [vmem:[#allocation5 + $0x8] sm:$0xff]
    %v96 = vld [vmem:[#allocation5 + $0x10] sm:$0xff]
    %v97 = vld [vmem:[#allocation5 + $0x18] sm:$0xff]
    %v98 = vld [vmem:[#allocation5 + $0x20] sm:$0xff]
    %v99 = vld [vmem:[#allocation5 + $0x28] sm:$0xff]
    %v100 = vld [vmem:[#allocation5 + $0x30] sm:$0xff]
    %v101 = vld [vmem:[#allocation5 + $0x38] sm:$0xff]
    %v102 = vld [vmem:[#allocation5 + $0x40] sm:$0xff]
    %v103 = vld [vmem:[#allocation5 + $0x48] sm:$0xff]
    %v104 = vld [vmem:[#allocation5 + $0x50] sm:$0xff]
    %v105 = vld [vmem:[#allocation5 + $0x58] sm:$0xff]
    %v106 = vld [vmem:[#allocation5 + $0x60] sm:$0xff]
    %v107 = vld [vmem:[#allocation5 + $0x68] sm:$0xff]
    %v108 = vld [vmem:[#allocation5 + $0x70] sm:$0xff]
    %v109 = vld [vmem:[#allocation5 + $0x78] sm:$0xff]
    %v110 = vld [vmem:[#allocation5 + $0x80] sm:$0xff]
    %v111 = vld [vmem:[#allocation5 + $0x88] sm:$0xff]
    %v112 = vld [vmem:[#allocation5 + $0x90] sm:$0xff]
    %v113 = vld [vmem:[#allocation5 + $0x98] sm:$0xff]
    %v114 = vld [vmem:[#allocation5 + $0xa0] sm:$0xff]
    %v115 = vld [vmem:[#allocation5 + $0xa8] sm:$0xff]
    %v116 = vld [vmem:[#allocation5 + $0xb0] sm:$0xff]
    %v117 = vld [vmem:[#allocation5 + $0xb8] sm:$0xff]
    %v118 = vld [vmem:[#allocation5 + $0xc0] sm:$0xff]
    %v119 = vld [vmem:[#allocation5 + $0xc8] sm:$0xff]
    %v120 = vld [vmem:[#allocation5 + $0xd0] sm:$0xff]
    %v121 = vld [vmem:[#allocation5 + $0xd8] sm:$0xff]
    %v122 = vld [vmem:[#allocation5 + $0xe0] sm:$0xff]
    %v123 = vld [vmem:[#allocation5 + $0xe8] sm:$0xff]
    %v124 = vld [vmem:[#allocation5 + $0xf0] sm:$0xff]
    %v125 = vld [vmem:[#allocation5 + $0xf8] sm:$0xff]
    %v126 = vld [vmem:[#allocation5 + $0x100] sm:$0xff]
    %v127 = vld [vmem:[#allocation5 + $0x108] sm:$0xff]
    %v128 = vld [vmem:[#allocation5 + $0x110] sm:$0xff]
    %v129 = vld [vmem:[#allocation5 + $0x118] sm:$0xff]
    %v130 = vld [vmem:[#allocation5 + $0x120] sm:$0xff]
    %v131 = vld [vmem:[#allocation5 + $0x128] sm:$0xff]
    %v132 = vld [vmem:[#allocation5 + $0x130] sm:$0xff]
    %v133 = vld [vmem:[#allocation5 + $0x138] sm:$0xff]
    %v134 = vld [vmem:[#allocation5 + $0x140] sm:$0xff]
    %v135 = vld [vmem:[#allocation5 + $0x148] sm:$0xff]
    %v136 = vld [vmem:[#allocation5 + $0x150] sm:$0xff]
    %v137 = vld [vmem:[#allocation5 + $0x158] sm:$0xff]
    %v138 = vld [vmem:[#allocation5 + $0x160] sm:$0xff]
    %v139 = vld [vmem:[#allocation5 + $0x168] sm:$0xff]
    %v140 = vld [vmem:[#allocation5 + $0x170] sm:$0xff]
    %v141 = vld [vmem:[#allocation5 + $0x178] sm:$0xff]
    %v142 = vld [vmem:[#allocation5 + $0x180] sm:$0xff]
    %v143 = vld [vmem:[#allocation5 + $0x188] sm:$0xff]
    %v144 = vld [vmem:[#allocation5 + $0x190] sm:$0xff]
    %v145 = vld [vmem:[#allocation5 + $0x198] sm:$0xff]
    %v146 = vld [vmem:[#allocation5 + $0x1a0] sm:$0xff]
    %v147 = vld [vmem:[#allocation5 + $0x1a8] sm:$0xff]
    %v148 = vld [vmem:[#allocation5 + $0x1b0] sm:$0xff]
    %v149 = vld [vmem:[#allocation5 + $0x1b8] sm:$0xff]
    %v150 = vld [vmem:[#allocation5 + $0x1c0] sm:$0xff]
    %v151 = vld [vmem:[#allocation5 + $0x1c8] sm:$0xff]
    %v152 = vld [vmem:[#allocation5 + $0x1d0] sm:$0xff]
    %v153 = vld [vmem:[#allocation5 + $0x1d8] sm:$0xff]
    %v154 = vld [vmem:[#allocation5 + $0x1e0] sm:$0xff]
    %v155 = vld [vmem:[#allocation5 + $0x1e8] sm:$0xff]
    %v156 = vld [vmem:[#allocation5 + $0x1f0] sm:$0xff]
    %v157 = vld [vmem:[#allocation5 + $0x1f8] sm:$0xff]
    %v158 = vld [vmem:[#allocation7] sm:$0xf]
    %v160 = vperm.slane %v158, 0
    %v161 = vperm.slane %v158, 1
    %v162 = vperm.slane %v158, 2
    %v163 = vperm.slane %v158, 3
    %v232 = vunpack.c.l.b16 %v94
    %v233 = vunpack.c.h.b16 %v94
    %v234 = vunpack.c.l.b16 %v95
    %v235 = vunpack.c.h.b16 %v95
    %v236 = vunpack.c.l.b16 %v96
    %v237 = vunpack.c.h.b16 %v96
    %v238 = vunpack.c.l.b16 %v97
    %v239 = vunpack.c.h.b16 %v97
    %v240 = vunpack.c.l.b16 %v98
    %v241 = vunpack.c.h.b16 %v98
    %v242 = vunpack.c.l.b16 %v99
    %v243 = vunpack.c.h.b16 %v99
    %v244 = vunpack.c.l.b16 %v100
    %v245 = vunpack.c.h.b16 %v100
    %v246 = vunpack.c.l.b16 %v101
    %v247 = vunpack.c.h.b16 %v101
    %v248 = vunpack.c.l.b16 %v102
    %v249 = vunpack.c.h.b16 %v102
    %v250 = vunpack.c.l.b16 %v103
    %v251 = vunpack.c.h.b16 %v103
    %v252 = vunpack.c.l.b16 %v104
    %v253 = vunpack.c.h.b16 %v104
    %v254 = vunpack.c.l.b16 %v105
    %v255 = vunpack.c.h.b16 %v105
    %v256 = vunpack.c.l.b16 %v106
    %v257 = vunpack.c.h.b16 %v106
    %v258 = vunpack.c.l.b16 %v107
    %v259 = vunpack.c.h.b16 %v107
    %v260 = vunpack.c.l.b16 %v108
    %v261 = vunpack.c.h.b16 %v108
    %v262 = vunpack.c.l.b16 %v109
    %v263 = vunpack.c.h.b16 %v109
    %v264 = vunpack.c.l.b16 %v110
    %v265 = vunpack.c.h.b16 %v110
    %v266 = vunpack.c.l.b16 %v111
    %v267 = vunpack.c.h.b16 %v111
    %v268 = vunpack.c.l.b16 %v112
    %v269 = vunpack.c.h.b16 %v112
    %v270 = vunpack.c.l.b16 %v113
    %v271 = vunpack.c.h.b16 %v113
    %v272 = vunpack.c.l.b16 %v114
    %v273 = vunpack.c.h.b16 %v114
    %v274 = vunpack.c.l.b16 %v115
    %v275 = vunpack.c.h.b16 %v115
    %v276 = vunpack.c.l.b16 %v116
    %v277 = vunpack.c.h.b16 %v116
    %v278 = vunpack.c.l.b16 %v117
    %v279 = vunpack.c.h.b16 %v117
    %v280 = vunpack.c.l.b16 %v118
    %v281 = vunpack.c.h.b16 %v118
    %v282 = vunpack.c.l.b16 %v119
    %v283 = vunpack.c.h.b16 %v119
    %v284 = vunpack.c.l.b16 %v120
    %v285 = vunpack.c.h.b16 %v120
    %v286 = vunpack.c.l.b16 %v121
    %v287 = vunpack.c.h.b16 %v121
    %v288 = vunpack.c.l.b16 %v122
    %v289 = vunpack.c.h.b16 %v122
    %v290 = vunpack.c.l.b16 %v123
    %v291 = vunpack.c.h.b16 %v123
    %v292 = vunpack.c.l.b16 %v124
    %v293 = vunpack.c.h.b16 %v124
    %v294 = vunpack.c.l.b16 %v125
    %v295 = vunpack.c.h.b16 %v125
    %v296 = vunpack.c.l.b16 %v126
    %v297 = vunpack.c.h.b16 %v126
    %v298 = vunpack.c.l.b16 %v127
    %v299 = vunpack.c.h.b16 %v127
    %v300 = vunpack.c.l.b16 %v128
    %v301 = vunpack.c.h.b16 %v128
    %v302 = vunpack.c.l.b16 %v129
    %v303 = vunpack.c.h.b16 %v129
    %v304 = vunpack.c.l.b16 %v130
    %v305 = vunpack.c.h.b16 %v130
    %v306 = vunpack.c.l.b16 %v131
    %v307 = vunpack.c.h.b16 %v131
    %v308 = vunpack.c.l.b16 %v132
    %v309 = vunpack.c.h.b16 %v132
    %v310 = vunpack.c.l.b16 %v133
    %v311 = vunpack.c.h.b16 %v133
    %v312 = vunpack.c.l.b16 %v134
    %v313 = vunpack.c.h.b16 %v134
    %v314 = vunpack.c.l.b16 %v135
    %v315 = vunpack.c.h.b16 %v135
    %v316 = vunpack.c.l.b16 %v136
    %v317 = vunpack.c.h.b16 %v136
    %v318 = vunpack.c.l.b16 %v137
    %v319 = vunpack.c.h.b16 %v137
    %v320 = vunpack.c.l.b16 %v138
    %v321 = vunpack.c.h.b16 %v138
    %v322 = vunpack.c.l.b16 %v139
    %v323 = vunpack.c.h.b16 %v139
    %v324 = vunpack.c.l.b16 %v140
    %v325 = vunpack.c.h.b16 %v140
    %v326 = vunpack.c.l.b16 %v141
    %v327 = vunpack.c.h.b16 %v141
    %v328 = vunpack.c.l.b16 %v142
    %v329 = vunpack.c.h.b16 %v142
    %v330 = vunpack.c.l.b16 %v143
    %v331 = vunpack.c.h.b16 %v143
    %v332 = vunpack.c.l.b16 %v144
    %v333 = vunpack.c.h.b16 %v144
    %v334 = vunpack.c.l.b16 %v145
    %v335 = vunpack.c.h.b16 %v145
    %v336 = vunpack.c.l.b16 %v146
    %v337 = vunpack.c.h.b16 %v146
    %v338 = vunpack.c.l.b16 %v147
    %v339 = vunpack.c.h.b16 %v147
    %v340 = vunpack.c.l.b16 %v148
    %v341 = vunpack.c.h.b16 %v148
    %v342 = vunpack.c.l.b16 %v149
    %v343 = vunpack.c.h.b16 %v149
    %v344 = vunpack.c.l.b16 %v150
    %v345 = vunpack.c.h.b16 %v150
    %v346 = vunpack.c.l.b16 %v151
    %v347 = vunpack.c.h.b16 %v151
    %v348 = vunpack.c.l.b16 %v152
    %v349 = vunpack.c.h.b16 %v152
    %v350 = vunpack.c.l.b16 %v153
    %v351 = vunpack.c.h.b16 %v153
    %v352 = vunpack.c.l.b16 %v154
    %v353 = vunpack.c.h.b16 %v154
    %v354 = vunpack.c.l.b16 %v155
    %v355 = vunpack.c.h.b16 %v155
    %v356 = vunpack.c.l.b16 %v156
    %v357 = vunpack.c.h.b16 %v156
    %v358 = vunpack.c.l.b16 %v157
    %v359 = vunpack.c.h.b16 %v157
    %v360 = vpack.c.b16 %v236, %v232
    %v361 = vpack.c.b16 %v237, %v233
    %v362 = vpack.c.b16 %v238, %v234
    %v363 = vpack.c.b16 %v239, %v235
    %v364 = vpack.c.b16 %v244, %v240
    %v365 = vpack.c.b16 %v245, %v241
    %v366 = vpack.c.b16 %v246, %v242
    %v367 = vpack.c.b16 %v247, %v243
    %v368 = vpack.c.b16 %v252, %v248
    %v369 = vpack.c.b16 %v253, %v249
    %v370 = vpack.c.b16 %v254, %v250
    %v371 = vpack.c.b16 %v255, %v251
    %v372 = vpack.c.b16 %v260, %v256
    %v373 = vpack.c.b16 %v261, %v257
    %v374 = vpack.c.b16 %v262, %v258
    %v375 = vpack.c.b16 %v263, %v259
    %v376 = vpack.c.b16 %v268, %v264
    %v377 = vpack.c.b16 %v269, %v265
    %v378 = vpack.c.b16 %v270, %v266
    %v379 = vpack.c.b16 %v271, %v267
    %v380 = vpack.c.b16 %v276, %v272
    %v381 = vpack.c.b16 %v277, %v273
    %v382 = vpack.c.b16 %v278, %v274
    %v383 = vpack.c.b16 %v279, %v275
    %v384 = vpack.c.b16 %v284, %v280
    %v385 = vpack.c.b16 %v285, %v281
    %v386 = vpack.c.b16 %v286, %v282
    %v387 = vpack.c.b16 %v287, %v283
    %v388 = vpack.c.b16 %v292, %v288
    %v389 = vpack.c.b16 %v293, %v289
    %v390 = vpack.c.b16 %v294, %v290
    %v391 = vpack.c.b16 %v295, %v291
    %v392 = vpack.c.b16 %v300, %v296
    %v393 = vpack.c.b16 %v301, %v297
    %v394 = vpack.c.b16 %v302, %v298
    %v395 = vpack.c.b16 %v303, %v299
    %v396 = vpack.c.b16 %v308, %v304
    %v397 = vpack.c.b16 %v309, %v305
    %v398 = vpack.c.b16 %v310, %v306
    %v399 = vpack.c.b16 %v311, %v307
    %v400 = vpack.c.b16 %v316, %v312
    %v401 = vpack.c.b16 %v317, %v313
    %v402 = vpack.c.b16 %v318, %v314
    %v403 = vpack.c.b16 %v319, %v315
    %v404 = vpack.c.b16 %v324, %v320
    %v405 = vpack.c.b16 %v325, %v321
    %v406 = vpack.c.b16 %v326, %v322
    %v407 = vpack.c.b16 %v327, %v323
    %v408 = vpack.c.b16 %v332, %v328
    %v409 = vpack.c.b16 %v333, %v329
    %v410 = vpack.c.b16 %v334, %v330
    %v411 = vpack.c.b16 %v335, %v331
    %v412 = vpack.c.b16 %v340, %v336
    %v413 = vpack.c.b16 %v341, %v337
    %v414 = vpack.c.b16 %v342, %v338
    %v415 = vpack.c.b16 %v343, %v339
    %v416 = vpack.c.b16 %v348, %v344
    %v417 = vpack.c.b16 %v349, %v345
    %v418 = vpack.c.b16 %v350, %v346
    %v419 = vpack.c.b16 %v351, %v347
    %v420 = vpack.c.b16 %v356, %v352
    %v421 = vpack.c.b16 %v357, %v353
    %v422 = vpack.c.b16 %v358, %v354
    %v423 = vpack.c.b16 %v359, %v355
    %488 = vmatpush.bf16.msra.mxu0 %v388
    %489 = vmatpush.bf16.msra.mxu0 %v384
    %490 = vmatpush.bf16.msra.mxu0 %v380
    %491 = vmatpush.bf16.msra.mxu0 %v376
    %492 = vmatpush.bf16.msra.mxu0 %v372
    %493 = vmatpush.bf16.msra.mxu0 %v368
    %494 = vmatpush.bf16.msra.mxu0 %v364
    %495 = vmatpush.bf16.msra.mxu0 %v360
    %496 = vmatmul.bf16.gmra.mxu0 %v90
    %v497 = vpop.f32.mrf.mxu0
    %v498 = vadd.f32 %v160, %v497
    %v499 = vpop.f32.mrf.mxu0
    %v500 = vadd.f32 %v160, %v499
    %501 = vmatmul.bf16.gmra.mxu0 %v92
    %v502 = vpop.f32.mrf.mxu0
    %v503 = vadd.f32 %v160, %v502
    %v504 = vpop.f32.mrf.mxu0
    %v505 = vadd.f32 %v160, %v504
    %506 = vdwg.mxu0
    %507 = vmatpush.bf16.msra.mxu0 %v420
    %508 = vmatpush.bf16.msra.mxu0 %v416
    %509 = vmatpush.bf16.msra.mxu0 %v412
    %510 = vmatpush.bf16.msra.mxu0 %v408
    %511 = vmatpush.bf16.msra.mxu0 %v404
    %512 = vmatpush.bf16.msra.mxu0 %v400
    %513 = vmatpush.bf16.msra.mxu0 %v396
    %514 = vmatpush.bf16.msra.mxu0 %v392
    %515 = vmatmul.bf16.gmra.mxu0 %v91
    %v516 = vpop.f32.mrf.mxu0
    %v517 = vadd.f32 %v498, %v516
    %v518 = vpop.f32.mrf.mxu0
    %v519 = vadd.f32 %v500, %v518
    %520 = vmatmul.bf16.gmra.mxu0 %v93
    %v521 = vpop.f32.mrf.mxu0
    %v522 = vadd.f32 %v503, %v521
    %v523 = vpop.f32.mrf.mxu0
    %v524 = vadd.f32 %v505, %v523
    %525 = vdwg.mxu0
    %526 = vmatpush.bf16.msra.mxu0 %v389
    %527 = vmatpush.bf16.msra.mxu0 %v385
    %528 = vmatpush.bf16.msra.mxu0 %v381
    %529 = vmatpush.bf16.msra.mxu0 %v377
    %530 = vmatpush.bf16.msra.mxu0 %v373
    %531 = vmatpush.bf16.msra.mxu0 %v369
    %532 = vmatpush.bf16.msra.mxu0 %v365
    %533 = vmatpush.bf16.msra.mxu0 %v361
    %534 = vmatmul.bf16.gmra.mxu0 %v90
    %v535 = vpop.f32.mrf.mxu0
    %v536 = vadd.f32 %v161, %v535
    %v537 = vpop.f32.mrf.mxu0
    %v538 = vadd.f32 %v161, %v537
    %539 = vmatmul.bf16.gmra.mxu0 %v92
    %v540 = vpop.f32.mrf.mxu0
    %v541 = vadd.f32 %v161, %v540
    %v542 = vpop.f32.mrf.mxu0
    %v543 = vadd.f32 %v161, %v542
    %544 = vdwg.mxu0
    %545 = vmatpush.bf16.msra.mxu0 %v421
    %546 = vmatpush.bf16.msra.mxu0 %v417
    %547 = vmatpush.bf16.msra.mxu0 %v413
    %548 = vmatpush.bf16.msra.mxu0 %v409
    %549 = vmatpush.bf16.msra.mxu0 %v405
    %550 = vmatpush.bf16.msra.mxu0 %v401
    %551 = vmatpush.bf16.msra.mxu0 %v397
    %552 = vmatpush.bf16.msra.mxu0 %v393
    %553 = vmatmul.bf16.gmra.mxu0 %v91
    %v554 = vpop.f32.mrf.mxu0
    %v555 = vadd.f32 %v536, %v554
    %v556 = vpop.f32.mrf.mxu0
    %v557 = vadd.f32 %v538, %v556
    %558 = vmatmul.bf16.gmra.mxu0 %v93
    %v559 = vpop.f32.mrf.mxu0
    %v560 = vadd.f32 %v541, %v559
    %v561 = vpop.f32.mrf.mxu0
    %v562 = vadd.f32 %v543, %v561
    %563 = vdwg.mxu0
    %564 = vmatpush.bf16.msra.mxu0 %v390
    %565 = vmatpush.bf16.msra.mxu0 %v386
    %566 = vmatpush.bf16.msra.mxu0 %v382
    %567 = vmatpush.bf16.msra.mxu0 %v378
    %568 = vmatpush.bf16.msra.mxu0 %v374
    %569 = vmatpush.bf16.msra.mxu0 %v370
    %570 = vmatpush.bf16.msra.mxu0 %v366
    %571 = vmatpush.bf16.msra.mxu0 %v362
    %572 = vmatmul.bf16.gmra.mxu0 %v90
    %v573 = vpop.f32.mrf.mxu0
    %v574 = vadd.f32 %v162, %v573
    %v575 = vpop.f32.mrf.mxu0
    %v576 = vadd.f32 %v162, %v575
    %577 = vmatmul.bf16.gmra.mxu0 %v92
    %v578 = vpop.f32.mrf.mxu0
    %v579 = vadd.f32 %v162, %v578
    %v580 = vpop.f32.mrf.mxu0
    %v581 = vadd.f32 %v162, %v580
    %582 = vdwg.mxu0
    %583 = vmatpush.bf16.msra.mxu0 %v422
    %584 = vmatpush.bf16.msra.mxu0 %v418
    %585 = vmatpush.bf16.msra.mxu0 %v414
    %586 = vmatpush.bf16.msra.mxu0 %v410
    %587 = vmatpush.bf16.msra.mxu0 %v406
    %588 = vmatpush.bf16.msra.mxu0 %v402
    %589 = vmatpush.bf16.msra.mxu0 %v398
    %590 = vmatpush.bf16.msra.mxu0 %v394
    %591 = vmatmul.bf16.gmra.mxu0 %v91
    %v592 = vpop.f32.mrf.mxu0
    %v593 = vadd.f32 %v574, %v592
    %v594 = vpop.f32.mrf.mxu0
    %v595 = vadd.f32 %v576, %v594
    %596 = vmatmul.bf16.gmra.mxu0 %v93
    %v597 = vpop.f32.mrf.mxu0
    %v598 = vadd.f32 %v579, %v597
    %v599 = vpop.f32.mrf.mxu0
    %v600 = vadd.f32 %v581, %v599
    %601 = vdwg.mxu0
    %602 = vmatpush.bf16.msra.mxu0 %v391
    %603 = vmatpush.bf16.msra.mxu0 %v387
    %604 = vmatpush.bf16.msra.mxu0 %v383
    %605 = vmatpush.bf16.msra.mxu0 %v379
    %606 = vmatpush.bf16.msra.mxu0 %v375
    %607 = vmatpush.bf16.msra.mxu0 %v371
    %608 = vmatpush.bf16.msra.mxu0 %v367
    %609 = vmatpush.bf16.msra.mxu0 %v363
    %610 = vmatmul.bf16.gmra.mxu0 %v90
    %v611 = vpop.f32.mrf.mxu0
    %v612 = vadd.f32 %v163, %v611
    %v613 = vpop.f32.mrf.mxu0
    %v614 = vadd.f32 %v163, %v613
    %615 = vmatmul.bf16.gmra.mxu0 %v92
    %v616 = vpop.f32.mrf.mxu0
    %v617 = vadd.f32 %v163, %v616
    %v618 = vpop.f32.mrf.mxu0
    %v619 = vadd.f32 %v163, %v618
    %620 = vdwg.mxu0
    %621 = vmatpush.bf16.msra.mxu0 %v423
    %622 = vmatpush.bf16.msra.mxu0 %v419
    %623 = vmatpush.bf16.msra.mxu0 %v415
    %624 = vmatpush.bf16.msra.mxu0 %v411
    %625 = vmatpush.bf16.msra.mxu0 %v407
    %626 = vmatpush.bf16.msra.mxu0 %v403
    %627 = vmatpush.bf16.msra.mxu0 %v399
    %628 = vmatpush.bf16.msra.mxu0 %v395
    %629 = vmatmul.bf16.gmra.mxu0 %v91
    %v630 = vpop.f32.mrf.mxu0
    %v631 = vadd.f32 %v612, %v630
    %v632 = vpop.f32.mrf.mxu0
    %v633 = vadd.f32 %v614, %v632
    %634 = vmatmul.bf16.gmra.mxu0 %v93
    %v635 = vpop.f32.mrf.mxu0
    %v636 = vadd.f32 %v617, %v635
    %v637 = vpop.f32.mrf.mxu0
    %v638 = vadd.f32 %v619, %v637
    %639 = vdwg.mxu0
    %v640 = vxor.u32 %v517, 2147483648
    %v641 = vxor.u32 %v519, 2147483648
    %v642 = vxor.u32 %v522, 2147483648
    %v643 = vxor.u32 %v524, 2147483648
    %v644 = vmul.f32 %v640, 1.442695
    %v645 = vpow.pop %v644
    %v646 = vmul.f32 %v641, 1.442695
    %v647 = vpow.pop %v646
    %v648 = vmul.f32 %v642, 1.442695
    %v649 = vpow.pop %v648
    %v650 = vmul.f32 %v643, 1.442695
    %v651 = vpow.pop %v650
    %v652 = vadd.f32 %v645, 1.0
    %v653 = vadd.f32 %v647, 1.0
    %v654 = vadd.f32 %v649, 1.0
    %v655 = vadd.f32 %v651, 1.0
    %v656 = vrcp.pop %v652
    %v657 = vmul.f32 %v652, %v656
    %v658 = vsub.f32 1.0, %v657
    %v659 = vmul.f32 %v656, %v658
    %v660 = vadd.f32 %v656, %v659
    %vm661 = vweird.f32 %v652
    %vm662 = vweird.f32 %v656
    %vm663 = vmor %vm661, %vm662
    %v664 = vsel %vm663, %v656, %v660
    %v665 = vand.u32 2147483647, %v652
    %vm666 = vcmp.eq.f32.partialorder %v665, 8.507059e+37
    %v667 = vand.u32 %v652, 2147483648
    %v668 = vor.u32 1.1754944e-38, %v667
    %v669 = vsel %vm666, %v668, %v664
    %v670 = vmul.f32 1.0, %v669
    %v671 = vrcp.pop %v653
    %v672 = vmul.f32 %v653, %v671
    %v673 = vsub.f32 1.0, %v672
    %v674 = vmul.f32 %v671, %v673
    %v675 = vadd.f32 %v671, %v674
    %vm676 = vweird.f32 %v653
    %vm677 = vweird.f32 %v671
    %vm678 = vmor %vm676, %vm677
    %v679 = vsel %vm678, %v671, %v675
    %v680 = vand.u32 2147483647, %v653
    %vm681 = vcmp.eq.f32.partialorder %v680, 8.507059e+37
    %v682 = vand.u32 %v653, 2147483648
    %v683 = vor.u32 1.1754944e-38, %v682
    %v684 = vsel %vm681, %v683, %v679
    %v685 = vmul.f32 1.0, %v684
    %v686 = vrcp.pop %v654
    %v687 = vmul.f32 %v654, %v686
    %v688 = vsub.f32 1.0, %v687
    %v689 = vmul.f32 %v686, %v688
    %v690 = vadd.f32 %v686, %v689
    %vm691 = vweird.f32 %v654
    %vm692 = vweird.f32 %v686
    %vm693 = vmor %vm691, %vm692
    %v694 = vsel %vm693, %v686, %v690
    %v695 = vand.u32 2147483647, %v654
    %vm696 = vcmp.eq.f32.partialorder %v695, 8.507059e+37
    %v697 = vand.u32 %v654, 2147483648
    %v698 = vor.u32 1.1754944e-38, %v697
    %v699 = vsel %vm696, %v698, %v694
    %v700 = vmul.f32 1.0, %v699
    %v701 = vrcp.pop %v655
    %v702 = vmul.f32 %v655, %v701
    %v703 = vsub.f32 1.0, %v702
    %v704 = vmul.f32 %v701, %v703
    %v705 = vadd.f32 %v701, %v704
    %vm706 = vweird.f32 %v655
    %vm707 = vweird.f32 %v701
    %vm708 = vmor %vm706, %vm707
    %v709 = vsel %vm708, %v701, %v705
    %v710 = vand.u32 2147483647, %v655
    %vm711 = vcmp.eq.f32.partialorder %v710, 8.507059e+37
    %v712 = vand.u32 %v655, 2147483648
    %v713 = vor.u32 1.1754944e-38, %v712
    %v714 = vsel %vm711, %v713, %v709
    %v715 = vmul.f32 1.0, %v714
    %v716 = vtanh.pop %v555
    %v717 = vtanh.pop %v557
    %v718 = vtanh.pop %v560
    %v719 = vtanh.pop %v562
    %v720 = vxor.u32 %v593, 2147483648
    %v721 = vxor.u32 %v595, 2147483648
    %v722 = vxor.u32 %v598, 2147483648
    %v723 = vxor.u32 %v600, 2147483648
    %v724 = vmul.f32 %v720, 1.442695
    %v725 = vpow.pop %v724
    %v726 = vmul.f32 %v721, 1.442695
    %v727 = vpow.pop %v726
    %v728 = vmul.f32 %v722, 1.442695
    %v729 = vpow.pop %v728
    %v730 = vmul.f32 %v723, 1.442695
    %v731 = vpow.pop %v730
    %v732 = vadd.f32 %v725, 1.0
    %v733 = vadd.f32 %v727, 1.0
    %v734 = vadd.f32 %v729, 1.0
    %v735 = vadd.f32 %v731, 1.0
    %v736 = vrcp.pop %v732
    %v737 = vmul.f32 %v732, %v736
    %v738 = vsub.f32 1.0, %v737
    %v739 = vmul.f32 %v736, %v738
    %v740 = vadd.f32 %v736, %v739
    %vm741 = vweird.f32 %v732
    %vm742 = vweird.f32 %v736
    %vm743 = vmor %vm741, %vm742
    %v744 = vsel %vm743, %v736, %v740
    %v745 = vand.u32 2147483647, %v732
    %vm746 = vcmp.eq.f32.partialorder %v745, 8.507059e+37
    %v747 = vand.u32 %v732, 2147483648
    %v748 = vor.u32 1.1754944e-38, %v747
    %v749 = vsel %vm746, %v748, %v744
    %v750 = vmul.f32 1.0, %v749
    %v751 = vrcp.pop %v733
    %v752 = vmul.f32 %v733, %v751
    %v753 = vsub.f32 1.0, %v752
    %v754 = vmul.f32 %v751, %v753
    %v755 = vadd.f32 %v751, %v754
    %vm756 = vweird.f32 %v733
    %vm757 = vweird.f32 %v751
    %vm758 = vmor %vm756, %vm757
    %v759 = vsel %vm758, %v751, %v755
    %v760 = vand.u32 2147483647, %v733
    %vm761 = vcmp.eq.f32.partialorder %v760, 8.507059e+37
    %v762 = vand.u32 %v733, 2147483648
    %v763 = vor.u32 1.1754944e-38, %v762
    %v764 = vsel %vm761, %v763, %v759
    %v765 = vmul.f32 1.0, %v764
    %v766 = vrcp.pop %v734
    %v767 = vmul.f32 %v734, %v766
    %v768 = vsub.f32 1.0, %v767
    %v769 = vmul.f32 %v766, %v768
    %v770 = vadd.f32 %v766, %v769
    %vm771 = vweird.f32 %v734
    %vm772 = vweird.f32 %v766
    %vm773 = vmor %vm771, %vm772
    %v774 = vsel %vm773, %v766, %v770
    %v775 = vand.u32 2147483647, %v734
    %vm776 = vcmp.eq.f32.partialorder %v775, 8.507059e+37
    %v777 = vand.u32 %v734, 2147483648
    %v778 = vor.u32 1.1754944e-38, %v777
    %v779 = vsel %vm776, %v778, %v774
    %v780 = vmul.f32 1.0, %v779
    %v781 = vrcp.pop %v735
    %v782 = vmul.f32 %v735, %v781
    %v783 = vsub.f32 1.0, %v782
    %v784 = vmul.f32 %v781, %v783
    %v785 = vadd.f32 %v781, %v784
    %vm786 = vweird.f32 %v735
    %vm787 = vweird.f32 %v781
    %vm788 = vmor %vm786, %vm787
    %v789 = vsel %vm788, %v781, %v785
    %v790 = vand.u32 2147483647, %v735
    %vm791 = vcmp.eq.f32.partialorder %v790, 8.507059e+37
    %v792 = vand.u32 %v735, 2147483648
    %v793 = vor.u32 1.1754944e-38, %v792
    %v794 = vsel %vm791, %v793, %v789
    %v795 = vmul.f32 1.0, %v794
    %v796 = vtanh.pop %v631
    %v797 = vtanh.pop %v633
    %v798 = vtanh.pop %v636
    %v799 = vtanh.pop %v638
    %v800 = vsub.f32 1.0, %v670
    %v801 = vsub.f32 1.0, %v685
    %v802 = vsub.f32 1.0, %v700
    %v803 = vsub.f32 1.0, %v715
    %v804 = vmul.f32 %v800, %v83
    %v805 = vmul.f32 %v801, %v85
    %v806 = vmul.f32 %v802, %v87
    %v807 = vmul.f32 %v803, %v89
    %v808 = vmul.f32 %v670, %v716
    %v809 = vmul.f32 %v685, %v717
    %v810 = vmul.f32 %v700, %v718
    %v811 = vmul.f32 %v715, %v719
    %v812 = vadd.f32 %v804, %v808
    %v813 = vadd.f32 %v805, %v809
    %v814 = vadd.f32 %v806, %v810
    %v815 = vadd.f32 %v807, %v811
    %v816 = vpack.c.bf16 %v813, %v812
    %v817 = vpack.c.bf16 %v815, %v814
    %v818 = vld [vmem:[#allocation8] sm:$0xf]
    %v819 = vld [vmem:[#allocation8 + $0x4] sm:$0xf]
    %v820 = vld [vmem:[#allocation8 + $0x8] sm:$0xf]
    %v821 = vld [vmem:[#allocation8 + $0xc] sm:$0xf]
    %v822 = vld [vmem:[#allocation8 + $0x10] sm:$0xf]
    %v823 = vld [vmem:[#allocation8 + $0x14] sm:$0xf]
    %v824 = vld [vmem:[#allocation8 + $0x18] sm:$0xf]
    %v825 = vld [vmem:[#allocation8 + $0x1c] sm:$0xf]
    %v826 = vld [vmem:[#allocation8 + $0x20] sm:$0xf]
    %v827 = vld [vmem:[#allocation8 + $0x24] sm:$0xf]
    %v828 = vld [vmem:[#allocation8 + $0x28] sm:$0xf]
    %v829 = vld [vmem:[#allocation8 + $0x2c] sm:$0xf]
    %v830 = vld [vmem:[#allocation8 + $0x30] sm:$0xf]
    %v831 = vld [vmem:[#allocation8 + $0x34] sm:$0xf]
    %v832 = vld [vmem:[#allocation8 + $0x38] sm:$0xf]
    %v833 = vld [vmem:[#allocation8 + $0x3c] sm:$0xf]
    %v834 = vld [vmem:[%s4] sm:$0x1]
    %v836 = vperm.slane %v834, 0
    %v854 = vunpack.c.l.b16 %v818
    %v855 = vunpack.c.l.b16 %v819
    %v856 = vunpack.c.l.b16 %v820
    %v857 = vunpack.c.l.b16 %v821
    %v858 = vunpack.c.l.b16 %v822
    %v859 = vunpack.c.l.b16 %v823
    %v860 = vunpack.c.l.b16 %v824
    %v861 = vunpack.c.l.b16 %v825
    %v862 = vunpack.c.l.b16 %v826
    %v863 = vunpack.c.l.b16 %v827
    %v864 = vunpack.c.l.b16 %v828
    %v865 = vunpack.c.l.b16 %v829
    %v866 = vunpack.c.l.b16 %v830
    %v867 = vunpack.c.l.b16 %v831
    %v868 = vunpack.c.l.b16 %v832
    %v869 = vunpack.c.l.b16 %v833
    %v870 = vpack.c.b16 %v855, %v854
    %v871 = vpack.c.b16 %v857, %v856
    %v872 = vpack.c.b16 %v859, %v858
    %v873 = vpack.c.b16 %v861, %v860
    %v874 = vpack.c.b16 %v863, %v862
    %v875 = vpack.c.b16 %v865, %v864
    %v876 = vpack.c.b16 %v867, %v866
    %v877 = vpack.c.b16 %v869, %v868
    %886 = vmatpush.bf16.msra.mxu0 %v877
    %887 = vmatpush.bf16.msra.mxu0 %v876
    %888 = vmatpush.bf16.msra.mxu0 %v875
    %889 = vmatpush.bf16.msra.mxu0 %v874
    %890 = vmatpush.bf16.msra.mxu0 %v873
    %891 = vmatpush.bf16.msra.mxu0 %v872
    %892 = vmatpush.bf16.msra.mxu0 %v871
    %893 = vmatpush.bf16.msra.mxu0 %v870
    %894 = vmatmul.bf16.gmra.mxu0 %v816
    %v895 = vpop.f32.mrf.mxu0
    %v896 = vadd.f32 %v836, %v895
    %v897 = vpop.f32.mrf.mxu0
    %v898 = vadd.f32 %v836, %v897
    %899 = vmatmul.bf16.gmra.mxu0 %v817
    %v900 = vpop.f32.mrf.mxu0
    %v901 = vadd.f32 %v836, %v900
    %v902 = vpop.f32.mrf.mxu0
    %v903 = vadd.f32 %v836, %v902
    %904 = vdwg.mxu0
    %v905 = vtanh.pop %v896
    %v906 = vtanh.pop %v898
    %v907 = vtanh.pop %v901
    %v908 = vtanh.pop %v903
    %v909 = vsub.f32 1.0, %v750
    %v910 = vsub.f32 1.0, %v765
    %v911 = vsub.f32 1.0, %v780
    %v912 = vsub.f32 1.0, %v795
    %v913 = vmul.f32 %v909, %v905
    %v914 = vmul.f32 %v910, %v906
    %v915 = vmul.f32 %v911, %v907
    %v916 = vmul.f32 %v912, %v908
    %v917 = vmul.f32 %v750, %v796
    %v918 = vmul.f32 %v765, %v797
    %v919 = vmul.f32 %v780, %v798
    %v920 = vmul.f32 %v795, %v799
    %v921 = vadd.f32 %v913, %v917
    %v922 = vadd.f32 %v914, %v918
    %v923 = vadd.f32 %v915, %v919
    %v924 = vadd.f32 %v916, %v920
    %925 = vst [vmem:[#allocation10] sm:$0xff] %v921
    %926 = vst [vmem:[#allocation10 + $0x10] sm:$0xff] %v922
    %927 = vst [vmem:[#allocation10 + $0x20] sm:$0xff] %v923
    %928 = vst [vmem:[#allocation10 + $0x30] sm:$0xff] %v924
    %929 = vst [vmem:[#allocation10 + $0x8] sm:$0xff] %v812
    %930 = vst [vmem:[#allocation10 + $0x18] sm:$0xff] %v813
    %931 = vst [vmem:[#allocation10 + $0x28] sm:$0xff] %v814
    %932 = vst [vmem:[#allocation10 + $0x38] sm:$0xff] %v815
    // Predicated region
    $region38: #{tpu_custom_call.1} parent=1 // pred_check
      _
    $region39: #{tpu_custom_call.1} parent=1 // pred_check_branch
      %934 = sbr.rel (0) target = $region41
    $region40: #{tpu_custom_call.1} parent=1 // pred_region
      %936 = vsyncadd [#allocation4], 0
      %s937 = sshll.u32 [#allocation10], 4
      %s938 = int_to_ptr.vmem [resolvable:$true] %s937
      %s939 = sshll.u32 %s5, 4
      %s940 = int_to_ptr.hbm [resolvable:$true] %s939
      %945 = dma.vmem_to_hbm [thread:$0]  %s938, 1024, %s940, [#allocation4], 256, 256, 16
    $region41: #{tpu_custom_call.1} parent=1 // pred_fallthru
      _
    // Predicated region
    $region42: #{tpu_custom_call.1} parent=1 // pred_check
      _
    $region43: #{tpu_custom_call.1} parent=1 // pred_check_branch
      %947 = sbr.rel (0) target = $region45
    $region44: #{tpu_custom_call.1} parent=1 // pred_region
      %949 = dma.done [#allocation4], 1024
    $region45: #{tpu_custom_call.1} parent=1 // pred_fallthru
      _
    %950 = vsyncpa [#allocation3], 1
    %951 = vsyncpa [#allocation6], 1
    %952 = vsyncpa [#allocation9], 1
    %953 = vsyncpa [#allocation4], 1

</llo_original>
